<compile_context>
chip_gen: v7x
topology: tpu7x:2x2x1
jax: 0.10.0
libtpu: 0.0.40
codegen_flags: <defaults>
</compile_context>

<pallas_src>
import functools
import math

import jax
import jax.numpy as jnp
from jax import lax
from jax.experimental import pallas as pl
from jax.experimental.pallas import tpu as pltpu

_MIB = 1024 * 1024


def _sdpa_kernel(q_ref, k_ref, v_ref, out_ref, attn_ref, *, scale, fold_scale):
    # q tile: (tq, D); k: (Lk, D); v: (Lk, Dv).  Native dtype into the MXU with
    # f32 accumulation; no explicit k.T (contract on k's last axis).
    q = q_ref[0]
    k = k_ref[0]
    v = v_ref[0]

    if fold_scale:
        # Exact (power-of-two scale or f32 inputs); touches the small q tile only.
        q = q * jnp.asarray(scale, q.dtype)

    scores = lax.dot_general(
        q, k, (((1,), (1,)), ((), ())), preferred_element_type=jnp.float32
    )  # (tq, Lk), f32

    if not fold_scale:
        scores = scores * jnp.float32(scale)

    # Softmax over the last axis (PyTorch Softmax(dim=2)), math in f32.
    m = jnp.max(scores, axis=-1, keepdims=True)
    # NOTE: exp over the full (tq, Lk) slab runs on the single EUP slot; once the
    # attn writeback is bf16 this is the likely co-bottleneck on v6e/v7x.
    p = jnp.exp(scores - m)
    denom = jnp.sum(p, axis=-1, keepdims=True)
    # EUP approximate reciprocal + one Newton step (only on the (tq, 1) column):
    # ~full f32 accuracy, VALU-cheap.
    inv = pl.reciprocal(denom, approx=True)
    inv = inv * (2.0 - denom * inv)

    # Single (possibly low-precision) materialization of the attention slab,
    # reused for both the HBM writeback and the attn @ V matmul — removes the
    # duplicate full-slab convert and lets the second matmul read the narrow
    # dtype from VMEM.
    attn_lp = (p * inv).astype(attn_ref.dtype)
    attn_ref[0] = attn_lp

    # TODO(synk): nn.Dropout(0.1) is identity in eval mode; training-mode dropout
    # (with torch RNG parity) is not reproduced here.

    out = lax.dot_general(
        attn_lp.astype(v.dtype), v, (((1,), (0,)), ((), ())),
        preferred_element_type=jnp.float32,
    )  # (tq, Dv), f32
    out_ref[0] = out.astype(out_ref.dtype)


def _vmem_capacity_bytes():
    try:
        info = pltpu.get_tpu_info()
        cap = getattr(info, "vmem_capacity_bytes", None)
        if cap:
            return int(cap)
    except Exception:
        pass
    return 64 * _MIB  # conservative (v7x-sized) fallback


def _is_power_of_two(x):
    try:
        m, _ = math.frexp(float(x))
    except (TypeError, ValueError):
        return False
    return abs(m) == 0.5


def _estimate_vmem_bytes(tq, lk, d, dv, in_isz, out_isz, attn_isz, kv_bufs):
    # BlockSpec-pipelined buffers plus the f32 softmax intermediates in the body.
    kv = kv_bufs * lk * (d + dv) * in_isz        # K + V blocks
    qb = 2 * tq * d * in_isz                     # double-buffered q tile
    ob = 2 * tq * dv * out_isz                   # double-buffered out tile
    ab = 2 * tq * lk * attn_isz                  # double-buffered attn tile
    interm = 3 * tq * lk * 4                     # f32 scores / exp / attn temps
    return kv + qb + ob + ab + interm


def _plan_tiling(lq, lk, d, dv, in_isz, out_isz, attn_isz):
    """Pick (tq, padded Lq, vmem_limit_bytes, single_buffer_kv) per generation."""
    vmem_cap = _vmem_capacity_bytes()
    small_vmem = vmem_cap <= 96 * _MIB           # v7x-class (64 MiB per core)
    vmem_limit = min((vmem_cap * 3) // 4, 112 * _MIB)   # 48 MiB v7x, 96 MiB v5e/v6e
    budget = int(vmem_limit * 0.85)              # headroom for compiler temporaries
    single_buffer_kv = small_vmem                # K/V reused across all q tiles
    kv_bufs = 1 if single_buffer_kv else 2

    if small_vmem:
        tq_cap = 128 if lk >= 4096 else 256
    else:
        tq_cap = 512                             # 128 MiB easily absorbs bigger tiles

    def fits(t):
        return _estimate_vmem_bytes(t, lk, d, dv, in_isz, out_isz, attn_isz,
                                    kv_bufs) <= budget

    # Small Lq: one full-extent block (always layout-legal, no tiny-tile fallback).
    if lq <= tq_cap and fits(lq):
        return lq, lq, vmem_limit, single_buffer_kv

    # Large / awkward Lq: pad to a multiple of 128 and tile with a 128-multiple.
    lq_pad = ((lq + 127) // 128) * 128
    tq = 128
    for t in (512, 384, 256, 128):
        if t <= tq_cap and lq_pad % t == 0 and fits(t):
            tq = t
            break
    # TODO(synk): for very long Lk (>= ~8K) a third grid axis tiling Lk (two-pass
    # or online softmax writing attn in (tq, tk) blocks) is needed to bound the
    # f32 intermediates on v7x's 64 MiB VMEM; not implemented here.
    return tq, lq_pad, vmem_limit, single_buffer_kv


def _kv_block_spec(block_shape, index_map, single_buffer):
    if single_buffer:
        try:
            # K/V block index is constant across the qi axis, so double-buffering
            # only helps at batch boundaries; single-buffering frees
            # Lk*(D+Dv)*itemsize of VMEM (valuable on v7x's 64 MiB).
            return pl.BlockSpec(block_shape, index_map, pipeline_mode=pl.Buffered(1))
        except Exception:
            pass  # older API without pipeline_mode / Buffered: fall back to default
    return pl.BlockSpec(block_shape, index_map)


def scaled_dot_product_attention(q, k, v, mask=None, *, scale=1.0 / 8.0,
                                 attn_dtype=None):
    """Pallas implementation of ScaledDotProductAttention.forward (mask=None path).

    The PyTorch module hard-codes the 1/8.0 scale (not 1/sqrt(D)); kept for parity.
    `attn_dtype` controls the dtype of the returned attention matrix; passing
    jnp.bfloat16 halves the dominant HBM writeback when the caller tolerates it.
    """
    # TODO(synk): mask (masked_fill with -inf) is not wired into the kernel; only
    # the mask=None path of the PyTorch forward is implemented.
    assert mask is None, "mask is not supported in this kernel"

    B, Lq, D = q.shape
    _, Lk, Dk = k.shape
    _, Lk_v, Dv = v.shape
    assert D == Dk and Lk == Lk_v

    out_dtype = jnp.dtype(q.dtype)
    attn_dtype = jnp.dtype(q.dtype if attn_dtype is None else attn_dtype)
    in_isz = jnp.dtype(q.dtype).itemsize
    out_isz = out_dtype.itemsize
    attn_isz = attn_dtype.itemsize

    tq, lq_pad, vmem_limit, single_buffer_kv = _plan_tiling(
        Lq, Lk, D, Dv, in_isz, out_isz, attn_isz)

    if lq_pad != Lq:
        # Pad the q length so every grid step gets a 128-multiple M tile (padded
        # rows give zero scores -> uniform softmax; sliced off below).
        q = jnp.pad(q, ((0, 0), (0, lq_pad - Lq), (0, 0)))

    grid = (B, lq_pad // tq)

    # Scale folding into the small q tile is exact for power-of-two scales or f32
    # inputs; otherwise scale the f32 scores inside the kernel.
    fold_scale = _is_power_of_two(scale) or in_isz == 4

    kv_spec = functools.partial(_kv_block_spec, single_buffer=single_buffer_kv)

    grid_spec = pltpu.PrefetchScalarGridSpec(
        num_scalar_prefetch=0,
        grid=grid,
        in_specs=[
            pl.BlockSpec((1, tq, D), lambda b, qi: (b, qi, 0)),
            # K / V block indices are constant across qi: DMA'd once per batch
            # element and reused across all q tiles.
            kv_spec((1, Lk, D), lambda b, qi: (b, 0, 0)),
            kv_spec((1, Lk, Dv), lambda b, qi: (b, 0, 0)),
        ],
        out_specs=[
            pl.BlockSpec((1, tq, Dv), lambda b, qi: (b, qi, 0)),
            pl.BlockSpec((1, tq, Lk), lambda b, qi: (b, qi, 0)),
        ],
    )

    cost = pl.CostEstimate(
        flops=2 * B * lq_pad * Lk * D + 2 * B * lq_pad * Lk * Dv,
        transcendentals=B * lq_pad * Lk,
        bytes_accessed=(
            in_isz * (B * lq_pad * D + B * Lk * D + B * Lk * Dv)
            + out_isz * B * lq_pad * Dv
            + attn_isz * B * lq_pad * Lk
        ),
    )

    out, attn = pl.pallas_call(
        functools.partial(_sdpa_kernel, scale=scale, fold_scale=fold_scale),
        out_shape=(
            jax.ShapeDtypeStruct((B, lq_pad, Dv), out_dtype),
            jax.ShapeDtypeStruct((B, lq_pad, Lk), attn_dtype),
        ),
        grid_spec=grid_spec,
        compiler_params=pltpu.CompilerParams(
            # Both grid axes are independent -> sharded across the 2 TensorCores
            # on v7x megacore (B * Lq//tq steps to distribute).
            dimension_semantics=("parallel", "parallel"),
            vmem_limit_bytes=vmem_limit,
        ),
        cost_estimate=cost,
    )(q, k, v)

    if lq_pad != Lq:
        out = out[:, :Lq]
        attn = attn[:, :Lq]
    return out, attn


def _reference(q, k, v):
    scores = jnp.einsum("bqd,bkd->bqk", q, k) / 8.0
    attn = jax.nn.softmax(scores, axis=-1)
    out = jnp.einsum("bqk,bkd->bqd", attn, v)
    return out, attn


if __name__ == "__main__":
    key = jax.random.PRNGKey(0)
    kq, kk, kv = jax.random.split(key, 3)

    B, Lq, Lk, D = 2, 8, 8, 32  # small shapes consistent with the module's forward
    q = jax.random.normal(kq, (B, Lq, D), dtype=jnp.float32)
    k = jax.random.normal(kk, (B, Lk, D), dtype=jnp.float32)
    v = jax.random.normal(kv, (B, Lk, D), dtype=jnp.float32)

    out_ref, attn_ref = _reference(q, k, v)

    # Default path: attn returned in the input dtype (parity with PyTorch).
    out, attn = scaled_dot_product_attention(q, k, v)
    jax.block_until_ready((out, attn))
    assert out.shape == out_ref.shape and attn.shape == attn_ref.shape
    assert jnp.allclose(out, out_ref, atol=1e-4, rtol=1e-4), "output mismatch"
    assert jnp.allclose(attn, attn_ref, atol=1e-4, rtol=1e-4), "attn mismatch"

    # Low-precision attention writeback path (halves the dominant HBM store);
    # tolerance loosened for bf16 probabilities.
    out_lp, attn_lp = scaled_dot_product_attention(q, k, v, attn_dtype=jnp.bfloat16)
    jax.block_until_ready((out_lp, attn_lp))
    assert jnp.allclose(out_lp, out_ref, atol=5e-2, rtol=5e-2), "bf16-attn output mismatch"
    assert jnp.allclose(attn_lp.astype(jnp.float32), attn_ref, atol=2e-2, rtol=2e-2), (
        "bf16 attn mismatch")

    print("KERNEL_OK")
</pallas_src>

<mosaic_0001>
module attributes {stable_mosaic.version = 11 : i64} {
  func.func @_sdpa_kernel(%arg0: i32, %arg1: i32, %arg2: memref<1x8x32xf32, #tpu.memory_space<vmem>>, %arg3: memref<1x8x32xf32, #tpu.memory_space<vmem>>, %arg4: memref<1x8x32xf32, #tpu.memory_space<vmem>>, %arg5: memref<1x8x32xf32, #tpu.memory_space<vmem>>, %arg6: memref<1x8x8xf32, #tpu.memory_space<vmem>>) attributes {dimension_semantics = [#tpu.dimension_semantics<parallel>, #tpu.dimension_semantics<parallel>], iteration_bounds = array<i64: 2, 1>, scalar_prefetch = 0 : i64, scratch_operands = 0 : i64, tpu.core_type = #tpu.core_type<tc>, window_params = [{transform_indices = @transform_0, window_bounds = array<i64: 1, 8, 32>}, {pipeline_mode = #tpu.pipeline_mode<synchronous>, transform_indices = @transform_1, window_bounds = array<i64: 1, 8, 32>}, {pipeline_mode = #tpu.pipeline_mode<synchronous>, transform_indices = @transform_2, window_bounds = array<i64: 1, 8, 32>}, {transform_indices = @transform_3, window_bounds = array<i64: 1, 8, 32>}, {transform_indices = @transform_4, window_bounds = array<i64: 1, 8, 8>}]} {
    %c0 = arith.constant 0 : index
    %c0_0 = arith.constant 0 : index
    %c0_1 = arith.constant 0 : index
    %0 = vector.load %arg2[%c0, %c0_0, %c0_1] : memref<1x8x32xf32, #tpu.memory_space<vmem>>, vector<1x8x32xf32>
    %1 = vector.shape_cast %0 : vector<1x8x32xf32> to vector<8x32xf32>
    %c0_2 = arith.constant 0 : index
    %c0_3 = arith.constant 0 : index
    %c0_4 = arith.constant 0 : index
    %2 = vector.load %arg3[%c0_2, %c0_3, %c0_4] : memref<1x8x32xf32, #tpu.memory_space<vmem>>, vector<1x8x32xf32>
    %3 = vector.shape_cast %2 : vector<1x8x32xf32> to vector<8x32xf32>
    %c0_5 = arith.constant 0 : index
    %c0_6 = arith.constant 0 : index
    %c0_7 = arith.constant 0 : index
    %4 = vector.load %arg4[%c0_5, %c0_6, %c0_7] : memref<1x8x32xf32, #tpu.memory_space<vmem>>, vector<1x8x32xf32>
    %5 = vector.shape_cast %4 : vector<1x8x32xf32> to vector<8x32xf32>
    %cst = arith.constant 1.250000e-01 : f32
    %6 = vector.broadcast %cst : f32 to vector<8x32xf32>
    %7 = arith.mulf %1, %6 : vector<8x32xf32>
    %cst_8 = arith.constant dense<0.000000e+00> : vector<8x8xf32>
    %8 = tpu.matmul %7, %3, %cst_8 {dimension_numbers = #tpu.dot_dimension_numbers<[1], [1], [0], [0], [0, 0, 1, 0], [], []>} : vector<8x32xf32>, vector<8x32xf32>, vector<8x8xf32> -> vector<8x8xf32>
    %cst_9 = arith.constant dense<0xFF800000> : vector<8xf32>
    %9 = vector.multi_reduction <maximumf>, %8, %cst_9 [1] : vector<8x8xf32> to vector<8xf32>
    %10 = vector.shape_cast %9 : vector<8xf32> to vector<8x1xf32>
    %11 = vector.broadcast %10 : vector<8x1xf32> to vector<8x8xf32>
    %12 = arith.subf %8, %11 : vector<8x8xf32>
    %13 = math.exp %12 : vector<8x8xf32>
    %cst_10 = arith.constant dense<0.000000e+00> : vector<8xf32>
    %14 = vector.multi_reduction <add>, %13, %cst_10 [1] : vector<8x8xf32> to vector<8xf32>
    %15 = vector.shape_cast %14 : vector<8xf32> to vector<8x1xf32>
    %16 = tpu.reciprocal %15 {approx = true} : vector<8x1xf32> -> vector<8x1xf32>
    %17 = arith.mulf %15, %16 : vector<8x1xf32>
    %cst_11 = arith.constant 2.000000e+00 : f32
    %18 = vector.broadcast %cst_11 : f32 to vector<8x1xf32>
    %19 = arith.subf %18, %17 : vector<8x1xf32>
    %20 = arith.mulf %16, %19 : vector<8x1xf32>
    %21 = vector.broadcast %20 : vector<8x1xf32> to vector<8x8xf32>
    %22 = arith.mulf %13, %21 : vector<8x8xf32>
    %c0_12 = arith.constant 0 : index
    %c0_13 = arith.constant 0 : index
    %c0_14 = arith.constant 0 : index
    %23 = vector.load %arg6[%c0_12, %c0_13, %c0_14] : memref<1x8x8xf32, #tpu.memory_space<vmem>>, vector<1x8x8xf32>
    %24 = vector.shape_cast %23 : vector<1x8x8xf32> to vector<8x8xf32>
    %25 = vector.shape_cast %22 : vector<8x8xf32> to vector<1x8x8xf32>
    tpu.vector_store %arg6[%c0_12, %c0_13, %c0_14], %25 {strides = array<i32>} : memref<1x8x8xf32, #tpu.memory_space<vmem>>, vector<1x8x8xf32>,
    %cst_15 = arith.constant dense<0.000000e+00> : vector<8x32xf32>
    %26 = tpu.matmul %22, %5, %cst_15 {dimension_numbers = #tpu.dot_dimension_numbers<[1], [0], [0], [1], [0, 0, 1, 1], [], []>} : vector<8x8xf32>, vector<8x32xf32>, vector<8x32xf32> -> vector<8x32xf32>
    %c0_16 = arith.constant 0 : index
    %c0_17 = arith.constant 0 : index
    %c0_18 = arith.constant 0 : index
    %27 = vector.load %arg5[%c0_16, %c0_17, %c0_18] : memref<1x8x32xf32, #tpu.memory_space<vmem>>, vector<1x8x32xf32>
    %28 = vector.shape_cast %27 : vector<1x8x32xf32> to vector<8x32xf32>
    %29 = vector.shape_cast %26 : vector<8x32xf32> to vector<1x8x32xf32>
    tpu.vector_store %arg5[%c0_16, %c0_17, %c0_18], %29 {strides = array<i32>} : memref<1x8x32xf32, #tpu.memory_space<vmem>>, vector<1x8x32xf32>,
    return
  }
  func.func @transform_0(%arg0: i32, %arg1: i32) -> (i32, i32, i32) {
    %c0_i32 = arith.constant 0 : i32
    %c0_i32_0 = arith.constant 0 : i32
    return %arg0, %arg1, %c0_i32 : i32, i32, i32
  }
  func.func @transform_1(%arg0: i32, %arg1: i32) -> (i32, i32, i32) {
    %c0_i32 = arith.constant 0 : i32
    %c0_i32_0 = arith.constant 0 : i32
    %c0_i32_1 = arith.constant 0 : i32
    return %arg0, %c0_i32, %c0_i32_0 : i32, i32, i32
  }
  func.func @transform_2(%arg0: i32, %arg1: i32) -> (i32, i32, i32) {
    %c0_i32 = arith.constant 0 : i32
    %c0_i32_0 = arith.constant 0 : i32
    %c0_i32_1 = arith.constant 0 : i32
    return %arg0, %c0_i32, %c0_i32_0 : i32, i32, i32
  }
  func.func @transform_3(%arg0: i32, %arg1: i32) -> (i32, i32, i32) {
    %c0_i32 = arith.constant 0 : i32
    %c0_i32_0 = arith.constant 0 : i32
    return %arg0, %arg1, %c0_i32 : i32, i32, i32
  }
  func.func @transform_4(%arg0: i32, %arg1: i32) -> (i32, i32, i32) {
    %c0_i32 = arith.constant 0 : i32
    %c0_i32_0 = arith.constant 0 : i32
    return %arg0, %arg1, %c0_i32 : i32, i32, i32
  }
}

</mosaic_0001>

<llo_original>
// kernel: tpu_custom_call.1
$region0: #{tpu_custom_call.1}
  #allocation0 [shape = 'u32[]', space=smem, size = 0x4, offset = 0x4, fixed_abs, tag = 'smem constant byte address 0x4 - core index']
  #allocation1 [shape = 'u32[144,128]{1,0:T(1,128)}', space=vmem, size = 0x12000, scoped, tag = 'internal scratch']
  %s0 = inlined_call_operand.hbm [shape: f32[2,8,32], index: 0, kind: input, shape index: {}]
  %s1 = inlined_call_operand.hbm [shape: f32[2,8,32], index: 1, kind: input, shape index: {}]
  %s2 = inlined_call_operand.hbm [shape: f32[2,8,32], index: 2, kind: input, shape index: {}]
  %s3 = inlined_call_operand.hbm [shape: f32[2,8,32], index: 3, kind: output, shape index: {0}]
  %s4 = inlined_call_operand.hbm [shape: f32[2,8,8], index: 4, kind: output, shape index: {1}]
  %5 = xla_tuple %s3, %s4
  %s6 = sld [smem:[#allocation0]]
  $region65: #{tpu_custom_call.1} parent=0
    _
  %s8 = ssub.s32 1, %s6
  %s9 = scalar_select 0, %s8, %s6
  $region1: #{tpu_custom_call.1} parent=0
    #allocation2 [shape = 'u8[8192]{0}', space=vmem, size = 0x2000, scoped, tag = 'input window, operand 0']
    #allocation3 [shape = 's32[2]{0}', space=sflag, size = 0x8, scoped, tag = 'scoped memory for tpu_custom_call.1']
    #allocation4 [shape = 's32[2]{0}', space=sflag, size = 0x8, scoped, tag = 'scoped memory for tpu_custom_call.1']
    #allocation5 [shape = 'u8[4096]{0}', space=vmem, size = 0x1000, scoped, tag = 'input window, operand 1, single buffered']
    #allocation6 [shape = 's32[1]{0}', space=sflag, size = 0x4, scoped, tag = 'scoped memory for tpu_custom_call.1']
    #allocation7 [shape = 'u8[4096]{0}', space=vmem, size = 0x1000, scoped, tag = 'input window, operand 2, single buffered']
    #allocation8 [shape = 'u8[8192]{0}', space=vmem, size = 0x2000, scoped, tag = 'output window, operand 0']
    #allocation9 [shape = 'u8[8192]{0}', space=vmem, size = 0x2000, scoped, tag = 'output window, operand 1']
    #allocation10 [shape = 's32[2]{0}', space=sflag, size = 0x8, scoped, tag = 'scoped memory for tpu_custom_call.1']
    %10 = vsyncpa [#allocation3], 0
    %s11 = scalar_lea.sflag [#allocation3], 1
    %12 = vsyncpa %s11, 0
    %13 = vsyncpa [#allocation6], 0
    %14 = vsyncpa [#allocation4], 0
    %s15 = scalar_lea.sflag [#allocation4], 1
    %16 = vsyncpa %s15, 0
    %17 = vsyncpa [#allocation10], 0
    %s18 = scalar_lea.sflag [#allocation10], 1
    %19 = vsyncpa %s18, 0
    loop: start=0, step=1, limit=4
    $region2: #{tpu_custom_call.1} parent=1 // loop_pre_header
      _
    $region3: #{tpu_custom_call.1} parent=1 // loop_header
      %s21 = sphi 0, %s25
      %p22 = scmp.ge.s32.totalorder %s21, 4
      %s28 = sphi 0, %s40
      %s29 = sphi 0, %s36
      %s30 = sphi 0, %s28
      %s31 = sphi 0, %s29
      %s32 = sphi 0, %s30
      %s33 = sphi 0, %s31
      %s45 = sphi 0, %s47
      %s48 = sphi 0, %s45
      %s49 = sphi 0, %s48
      %s65 = sphi 0, %s49
      %s71 = sphi 0, %s73
      %s74 = sphi 0, %s71
      %s75 = sphi 0, %s74
      %s91 = sphi 0, %s75
      %s97 = sphi 0, %s99
      %s100 = sphi 0, %s97
      %s101 = sphi 0, %s100
      %s117 = sphi 0, %s101
      %s125 = sphi 0, %s127
      %s128 = sphi 0, %s125
      %s129 = sphi 0, %s128
      %s145 = sphi 0, %s129
      %s153 = sphi 0, %s155
      %s156 = sphi 0, %s153
      %s157 = sphi 0, %s156
      %s173 = sphi 0, %s157
    $region4: #{tpu_custom_call.1} parent=1 // loop_header_branch
      %24 = sbr.rel (%p22) target = $region8
    $region5: #{tpu_custom_call.1} parent=1 // loop_body
      %s26 = ssub.s32 %s21, 1
      %s27 = ssub.s32 %s21, 2
      %s34 = sadd.s32 1, %s29
      %p35 = scmp.ge.s32.totalorder %s34, 1
      %s36 = scalar_select %p35, 0, %s34
      %s37 = sadd.s32 1, %s28
      %s38 = scalar_select %p35, %s37, %s28
      %p39 = scmp.ge.s32.totalorder %s38, 2
      %s40 = scalar_select %p39, 0, %s38
      %s41 = ssub.s32 %s28, %s40
      %s42 = ssub.s32 %s29, %s36
      %s43 = sor.u32 %s41, %s42
      %p44 = scmp.eq.s32.totalorder %s43, 0
      %s46 = sadd.s32 %s45, 1
      %s47 = scalar_select %p44, %s45, %s46
      %p50 = pneg %p44
      %p51 = scmp.eq.s32.totalorder %s21, 1
      %p52 = por %p50, %p51
      %p53 = scmp.ne.s32.totalorder %s45, %s48
      %p54 = scmp.eq.s32.totalorder %s21, 0
      %p55 = por %p53, %p54
      %p56 = scmp.ne.s32.totalorder %s45, %s48
      %p57 = scmp.eq.s32.totalorder %s26, 1
      %p58 = por %p56, %p57
      %p59 = scmp.ne.s32.totalorder %s48, %s49
      %p60 = scmp.eq.s32.totalorder %s26, 0
      %p61 = por %p59, %p60
      %p62 = scmp.ne.s32.totalorder %s48, %s49
      %p63 = scmp.eq.s32.totalorder %s27, 1
      %p64 = por %p62, %p63
      %p66 = scmp.ne.s32.totalorder %s49, %s65
      %p67 = scmp.eq.s32.totalorder %s27, 0
      %p68 = por %p66, %p67
      %s69 = ssub.s32 %s28, %s40
      %p70 = scmp.eq.s32.totalorder %s69, 0
      %s72 = sadd.s32 %s71, 1
      %s73 = scalar_select %p70, %s71, %s72
      %p76 = pneg %p70
      %p77 = scmp.eq.s32.totalorder %s21, 1
      %p78 = por %p76, %p77
      %p79 = scmp.ne.s32.totalorder %s71, %s74
      %p80 = scmp.eq.s32.totalorder %s21, 0
      %p81 = por %p79, %p80
      %p82 = scmp.ne.s32.totalorder %s71, %s74
      %p83 = scmp.eq.s32.totalorder %s26, 1
      %p84 = por %p82, %p83
      %p85 = scmp.ne.s32.totalorder %s74, %s75
      %p86 = scmp.eq.s32.totalorder %s26, 0
      %p87 = por %p85, %p86
      %p88 = scmp.ne.s32.totalorder %s74, %s75
      %p89 = scmp.eq.s32.totalorder %s27, 1
      %p90 = por %p88, %p89
      %p92 = scmp.ne.s32.totalorder %s75, %s91
      %p93 = scmp.eq.s32.totalorder %s27, 0
      %p94 = por %p92, %p93
      %s95 = ssub.s32 %s28, %s40
      %p96 = scmp.eq.s32.totalorder %s95, 0
      %s98 = sadd.s32 %s97, 1
      %s99 = scalar_select %p96, %s97, %s98
      %p102 = pneg %p96
      %p103 = scmp.eq.s32.totalorder %s21, 1
      %p104 = por %p102, %p103
      %p105 = scmp.ne.s32.totalorder %s97, %s100
      %p106 = scmp.eq.s32.totalorder %s21, 0
      %p107 = por %p105, %p106
      %p108 = scmp.ne.s32.totalorder %s97, %s100
      %p109 = scmp.eq.s32.totalorder %s26, 1
      %p110 = por %p108, %p109
      %p111 = scmp.ne.s32.totalorder %s100, %s101
      %p112 = scmp.eq.s32.totalorder %s26, 0
      %p113 = por %p111, %p112
      %p114 = scmp.ne.s32.totalorder %s100, %s101
      %p115 = scmp.eq.s32.totalorder %s27, 1
      %p116 = por %p114, %p115
      %p118 = scmp.ne.s32.totalorder %s101, %s117
      %p119 = scmp.eq.s32.totalorder %s27, 0
      %p120 = por %p118, %p119
      %s121 = ssub.s32 %s28, %s40
      %s122 = ssub.s32 %s29, %s36
      %s123 = sor.u32 %s121, %s122
      %p124 = scmp.eq.s32.totalorder %s123, 0
      %s126 = sadd.s32 %s125, 1
      %s127 = scalar_select %p124, %s125, %s126
      %p130 = pneg %p124
      %p131 = scmp.eq.s32.totalorder %s21, 1
      %p132 = por %p130, %p131
      %p133 = scmp.ne.s32.totalorder %s125, %s128
      %p134 = scmp.eq.s32.totalorder %s21, 0
      %p135 = por %p133, %p134
      %p136 = scmp.ne.s32.totalorder %s125, %s128
      %p137 = scmp.eq.s32.totalorder %s26, 1
      %p138 = por %p136, %p137
      %p139 = scmp.ne.s32.totalorder %s128, %s129
      %p140 = scmp.eq.s32.totalorder %s26, 0
      %p141 = por %p139, %p140
      %p142 = scmp.ne.s32.totalorder %s128, %s129
      %p143 = scmp.eq.s32.totalorder %s27, 1
      %p144 = por %p142, %p143
      %p146 = scmp.ne.s32.totalorder %s129, %s145
      %p147 = scmp.eq.s32.totalorder %s27, 0
      %p148 = por %p146, %p147
      %s149 = ssub.s32 %s28, %s40
      %s150 = ssub.s32 %s29, %s36
      %s151 = sor.u32 %s149, %s150
      %p152 = scmp.eq.s32.totalorder %s151, 0
      %s154 = sadd.s32 %s153, 1
      %s155 = scalar_select %p152, %s153, %s154
      %p158 = pneg %p152
      %p159 = scmp.eq.s32.totalorder %s21, 1
      %p160 = por %p158, %p159
      %p161 = scmp.ne.s32.totalorder %s153, %s156
      %p162 = scmp.eq.s32.totalorder %s21, 0
      %p163 = por %p161, %p162
      %p164 = scmp.ne.s32.totalorder %s153, %s156
      %p165 = scmp.eq.s32.totalorder %s26, 1
      %p166 = por %p164, %p165
      %p167 = scmp.ne.s32.totalorder %s156, %s157
      %p168 = scmp.eq.s32.totalorder %s26, 0
      %p169 = por %p167, %p168
      %p170 = scmp.ne.s32.totalorder %s156, %s157
      %p171 = scmp.eq.s32.totalorder %s27, 1
      %p172 = por %p170, %p171
      %p174 = scmp.ne.s32.totalorder %s157, %s173
      %p175 = scmp.eq.s32.totalorder %s27, 0
      %p176 = por %p174, %p175
      %p177 = scmp.le.s32.totalorder 1, %s21
      %p178 = scmp.lt.s32.totalorder %s21, 3
      %p179 = pnand %p177, %p178
      %p180 = pneg %p179
      // Predicated region
      $region9: #{tpu_custom_call.1} parent=5 // pred_check
        _
      $region10: #{tpu_custom_call.1} parent=5 // pred_check_branch
        %182 = sbr.rel (%p179) target = $region12
      $region11: #{tpu_custom_call.1} parent=5 // pred_region
        %s183 = ssub.s32 %s21, 1
        // Predicated region
        $region13: #{tpu_custom_call.1} parent=11 // pred_check
          %p184 = pneg %p87
        $region14: #{tpu_custom_call.1} parent=11 // pred_check_branch
          %186 = sbr.rel (%p184) target = $region16
        $region15: #{tpu_custom_call.1} parent=11 // pred_region
          %s188 = ssub.s32 128, 128
          %189 = vsyncadd [#allocation6], %s188
          %s190 = smul.addr %s30, 128
          %s191 = scalar_lea.hbm %s1, %s190
          %s193 = sshll.u32 [#allocation5], 4
          %s194 = int_to_ptr.vmem [resolvable:$true] %s193
          %196 = dma.hbm_to_vmem [thread:$0]  %s191, 128, %s194, [#allocation6]
        $region16: #{tpu_custom_call.1} parent=11 // pred_fallthru
          _
        // Predicated region
        $region17: #{tpu_custom_call.1} parent=11 // pred_check
          %p197 = pneg %p113
        $region18: #{tpu_custom_call.1} parent=11 // pred_check_branch
          %199 = sbr.rel (%p197) target = $region20
        $region19: #{tpu_custom_call.1} parent=11 // pred_region
          %s201 = ssub.s32 128, 128
          %202 = vsyncadd [#allocation6], %s201
          %s203 = smul.addr %s30, 128
          %s204 = scalar_lea.hbm %s2, %s203
          %s206 = sshll.u32 [#allocation7], 4
          %s207 = int_to_ptr.vmem [resolvable:$true] %s206
          %209 = dma.hbm_to_vmem [thread:$0]  %s204, 128, %s207, [#allocation6]
        $region20: #{tpu_custom_call.1} parent=11 // pred_fallthru
          _
      $region12: #{tpu_custom_call.1} parent=5 // pred_fallthru
        _
      %p210 = scmp.lt.s32.totalorder %s21, 2
      // Predicated region
      $region21: #{tpu_custom_call.1} parent=5 // pred_check
        %p211 = pneg %p210
      $region22: #{tpu_custom_call.1} parent=5 // pred_check_branch
        %213 = sbr.rel (%p211) target = $region24
      $region23: #{tpu_custom_call.1} parent=5 // pred_region
        // Predicated region
        $region25: #{tpu_custom_call.1} parent=23 // pred_check
          %p214 = pneg %p55
        $region26: #{tpu_custom_call.1} parent=23 // pred_check_branch
          %216 = sbr.rel (%p214) target = $region28
        $region27: #{tpu_custom_call.1} parent=23 // pred_region
          %s217 = sand.u32 %s45, 1
          %s218 = scalar_lea.sflag [#allocation3], %s217
          %s219 = sand.u32 %s45, 1
          %s220 = smul.addr %s219, 8
          %s221 = scalar_lea.vmem [#allocation2], %s220
          %s223 = ssub.s32 128, 128
          %224 = vsyncadd %s218, %s223
          %s225 = sadd.s32 %s29, %s28
          %s226 = smul.addr %s225, 128
          %s227 = scalar_lea.hbm %s0, %s226
          %s229 = sshll.u32 %s221, 4
          %s230 = int_to_ptr.vmem [resolvable:$true] %s229
          %232 = dma.hbm_to_vmem [thread:$0]  %s227, 128, %s230, %s218
        $region28: #{tpu_custom_call.1} parent=23 // pred_fallthru
          _
      $region24: #{tpu_custom_call.1} parent=5 // pred_fallthru
        _
      %p233 = scmp.le.s32.totalorder 1, %s21
      %p234 = scmp.lt.s32.totalorder %s21, 3
      %p235 = pnand %p233, %p234
      %p236 = pneg %p235
      // Predicated region
      $region29: #{tpu_custom_call.1} parent=5 // pred_check
        _
      $region30: #{tpu_custom_call.1} parent=5 // pred_check_branch
        %238 = sbr.rel (%p235) target = $region32
      $region31: #{tpu_custom_call.1} parent=5 // pred_region
        %s239 = ssub.s32 %s21, 1
        %s240 = sand.u32 %s48, 1
        %s241 = scalar_lea.sflag [#allocation3], %s240
        %s242 = sand.u32 %s48, 1
        %s243 = smul.addr %s242, 8
        %s244 = scalar_lea.vmem [#allocation2], %s243
        // Predicated region
        $region33: #{tpu_custom_call.1} parent=31 // pred_check
          %p245 = pneg %p61
        $region34: #{tpu_custom_call.1} parent=31 // pred_check_branch
          %247 = sbr.rel (%p245) target = $region36
        $region35: #{tpu_custom_call.1} parent=31 // pred_region
          %248 = dma.done %s241, 128
        $region36: #{tpu_custom_call.1} parent=31 // pred_fallthru
          _
        // Predicated region
        $region37: #{tpu_custom_call.1} parent=31 // pred_check
          %p249 = pneg %p87
        $region38: #{tpu_custom_call.1} parent=31 // pred_check_branch
          %251 = sbr.rel (%p249) target = $region40
        $region39: #{tpu_custom_call.1} parent=31 // pred_region
          %252 = dma.done [#allocation6], 128
        $region40: #{tpu_custom_call.1} parent=31 // pred_fallthru
          _
        // Predicated region
        $region41: #{tpu_custom_call.1} parent=31 // pred_check
          %p253 = pneg %p113
        $region42: #{tpu_custom_call.1} parent=31 // pred_check_branch
          %255 = sbr.rel (%p253) target = $region44
        $region43: #{tpu_custom_call.1} parent=31 // pred_region
          %256 = dma.done [#allocation6], 128
        $region44: #{tpu_custom_call.1} parent=31 // pred_fallthru
          _
        %s257 = sand.u32 %s48, 1
        %s258 = scalar_lea.sflag [#allocation3], %s257
        %s259 = sand.u32 %s48, 1
        %s260 = smul.addr %s259, 8
        %s261 = scalar_lea.vmem [#allocation2], %s260
        %p262 = pneg %p61
        %p263 = pneg %p58
        %p264 = pneg %p87
        %p265 = pneg %p84
        %p266 = pneg %p113
        %p267 = pneg %p110
        %p268 = pneg %p141
        %p269 = pneg %p138
        %s270 = sand.u32 %s128, 1
        %s271 = scalar_lea.sflag [#allocation4], %s270
        %s272 = sand.u32 %s128, 1
        %s273 = smul.addr %s272, 8
        %s274 = scalar_lea.vmem [#allocation8], %s273
        %p275 = pneg %p169
        %p276 = pneg %p166
        %s277 = sand.u32 %s156, 1
        %s278 = scalar_lea.sflag [#allocation10], %s277
        %s279 = sand.u32 %s156, 1
        %s280 = smul.addr %s279, 8
        %s281 = scalar_lea.vmem [#allocation9], %s280
        %v282 = vld [vmem:[%s244] sm:$0xff]
        %v283 = vld [vmem:[#allocation5] sm:$0xff]
        %v284 = vld [vmem:[#allocation7] sm:$0xff]
        %v285 = vmul.f32 %v282, 0.125
        %vm286 = vcmask 261120
        %v288 = vsel %vm286, %v285, 0
        %v291 = vsel %vm286, %v283, 0
        %293 = vmatprep.subr.mxu0 0.0
        %294 = vmatpush1.xpose.msra.mxu0 %v291
        %295 = vmatprep.subr.mxu0 0.0
        %296 = vmatpush1.xpose.msra.mxu0 0.0
        %297 = vmatprep.subr.mxu0 0.0
        %298 = vmatpush1.xpose.msra.mxu0 0.0
        %299 = vmatprep.subr.mxu0 0.0
        %300 = vmatpush1.xpose.msra.mxu0 0.0
        %301 = vmatprep.subr.mxu0 0.0
        %302 = vmatpush1.xpose.msra.mxu0 0.0
        %303 = vmatprep.subr.mxu0 0.0
        %304 = vmatpush1.xpose.msra.mxu0 0.0
        %305 = vmatprep.subr.mxu0 0.0
        %306 = vmatpush1.xpose.msra.mxu0 0.0
        %307 = vmatprep.subr.mxu0 0.0
        %308 = vmatpush1.xpose.msra.mxu0 0.0
        %309 = vmatprep.subr.mxu0 0.0
        %310 = vmatpush1.xpose.msra.mxu0 0.0
        %311 = vmatprep.subr.mxu0 0.0
        %312 = vmatpush1.xpose.msra.mxu0 0.0
        %313 = vmatprep.subr.mxu0 0.0
        %314 = vmatpush1.xpose.msra.mxu0 0.0
        %315 = vmatprep.subr.mxu0 0.0
        %316 = vmatpush1.xpose.msra.mxu0 0.0
        %317 = vmatprep.subr.mxu0 0.0
        %318 = vmatpush1.xpose.msra.mxu0 0.0
        %319 = vmatprep.subr.mxu0 0.0
        %320 = vmatpush1.xpose.msra.mxu0 0.0
        %321 = vmatprep.subr.mxu0 0.0
        %322 = vmatpush1.xpose.msra.mxu0 0.0
        %323 = vmatprep.subr.mxu0 0.0
        %324 = vmatpush1.xpose.msra.mxu0 0.0
        %325 = vmatprep.subr.mxu0 0.0
        %326 = vmatpush1.xpose.msra.mxu0 0.0
        %327 = vmatprep.subr.mxu0 0.0
        %328 = vmatpush1.xpose.msra.mxu0 0.0
        %329 = vmatprep.subr.mxu0 0.0
        %330 = vmatpush1.xpose.msra.mxu0 0.0
        %331 = vmatprep.subr.mxu0 0.0
        %332 = vmatpush1.xpose.msra.mxu0 0.0
        %333 = vmatprep.subr.mxu0 0.0
        %334 = vmatpush1.xpose.msra.mxu0 0.0
        %335 = vmatprep.subr.mxu0 0.0
        %336 = vmatpush1.xpose.msra.mxu0 0.0
        %337 = vmatprep.subr.mxu0 0.0
        %338 = vmatpush1.xpose.msra.mxu0 0.0
        %339 = vmatprep.subr.mxu0 0.0
        %340 = vmatpush1.xpose.msra.mxu0 0.0
        %341 = vmatprep.subr.mxu0 0.0
        %342 = vmatpush1.xpose.msra.mxu0 0.0
        %343 = vmatprep.subr.mxu0 0.0
        %344 = vmatpush1.xpose.msra.mxu0 0.0
        %345 = vmatprep.subr.mxu0 0.0
        %346 = vmatpush1.xpose.msra.mxu0 0.0
        %347 = vmatprep.subr.mxu0 0.0
        %348 = vmatpush1.xpose.msra.mxu0 0.0
        %349 = vmatprep.subr.mxu0 0.0
        %350 = vmatpush1.xpose.msra.mxu0 0.0
        %351 = vmatprep.subr.mxu0 0.0
        %352 = vmatpush1.xpose.msra.mxu0 0.0
        %353 = vmatprep.subr.mxu0 0.0
        %354 = vmatpush1.xpose.msra.mxu0 0.0
        %355 = vmatprep.subr.mxu0 0.0
        %356 = vmatpush1.xpose.msra.mxu0 0.0
        %357 = vmatprep.mubr.f32.mxu0 0.0
        %358 = vmatmul.mubr.f32.gmra.mrb[0].mxu0 %v288
        %v359 = vpop.f32.mrb[0].mxu0
        %v360 = vadd.f32 0.0, %v359
        %v361 = vpop.f32.mrb[0].mxu0
        %362 = vdwg.mxu0
        %vm363 = vcmask 64512
        %v364 = vsel %vm363, %v360, -inf
        %365 = vmax.xlane.f32.xlu0 %v364
        %v366 = vpop.xlane.xlu0 %365
        %v367 = vsub.f32 %v360, %v366
        %v368 = vmul.f32 %v367, 1.442695
        %v369 = vpow.pop %v368
        %v370 = vsel %vm363, %v369, 0.0
        %371 = vadd.xlane.f32.xlu0 %v370
        %v372 = vpop.xlane.xlu0 %371
        %v373 = vrcp.pop %v372
        %v374 = vmul.f32 %v372, %v373
        %v375 = vsub.f32 2.0, %v374
        %v376 = vmul.f32 %v373, %v375
        %v377 = vmul.f32 %v369, %v376
        %378 = vst.msk [vmem:[%s281] sm:$0xff] %vm363, %v377
        %v380 = vsel %vm363, %v377, 0
        %382 = vmatprep.subr.mxu0 0.0
        %383 = vmatpush1.msra.mxu0 %v284
        %384 = vmatprep.subr.mxu0 0.0
        %385 = vmatpush1.msra.mxu0 0.0
        %386 = vmatprep.subr.mxu0 0.0
        %387 = vmatpush1.msra.mxu0 0.0
        %388 = vmatprep.subr.mxu0 0.0
        %389 = vmatpush1.msra.mxu0 0.0
        %390 = vmatprep.subr.mxu0 0.0
        %391 = vmatpush1.msra.mxu0 0.0
        %392 = vmatprep.subr.mxu0 0.0
        %393 = vmatpush1.msra.mxu0 0.0
        %394 = vmatprep.subr.mxu0 0.0
        %395 = vmatpush1.msra.mxu0 0.0
        %396 = vmatprep.subr.mxu0 0.0
        %397 = vmatpush1.msra.mxu0 0.0
        %398 = vmatprep.subr.mxu0 0.0
        %399 = vmatpush1.msra.mxu0 0.0
        %400 = vmatprep.subr.mxu0 0.0
        %401 = vmatpush1.msra.mxu0 0.0
        %402 = vmatprep.subr.mxu0 0.0
        %403 = vmatpush1.msra.mxu0 0.0
        %404 = vmatprep.subr.mxu0 0.0
        %405 = vmatpush1.msra.mxu0 0.0
        %406 = vmatprep.subr.mxu0 0.0
        %407 = vmatpush1.msra.mxu0 0.0
        %408 = vmatprep.subr.mxu0 0.0
        %409 = vmatpush1.msra.mxu0 0.0
        %410 = vmatprep.subr.mxu0 0.0
        %411 = vmatpush1.msra.mxu0 0.0
        %412 = vmatprep.subr.mxu0 0.0
        %413 = vmatpush1.msra.mxu0 0.0
        %414 = vmatprep.subr.mxu0 0.0
        %415 = vmatpush1.msra.mxu0 0.0
        %416 = vmatprep.subr.mxu0 0.0
        %417 = vmatpush1.msra.mxu0 0.0
        %418 = vmatprep.subr.mxu0 0.0
        %419 = vmatpush1.msra.mxu0 0.0
        %420 = vmatprep.subr.mxu0 0.0
        %421 = vmatpush1.msra.mxu0 0.0
        %422 = vmatprep.subr.mxu0 0.0
        %423 = vmatpush1.msra.mxu0 0.0
        %424 = vmatprep.subr.mxu0 0.0
        %425 = vmatpush1.msra.mxu0 0.0
        %426 = vmatprep.subr.mxu0 0.0
        %427 = vmatpush1.msra.mxu0 0.0
        %428 = vmatprep.subr.mxu0 0.0
        %429 = vmatpush1.msra.mxu0 0.0
        %430 = vmatprep.subr.mxu0 0.0
        %431 = vmatpush1.msra.mxu0 0.0
        %432 = vmatprep.subr.mxu0 0.0
        %433 = vmatpush1.msra.mxu0 0.0
        %434 = vmatprep.subr.mxu0 0.0
        %435 = vmatpush1.msra.mxu0 0.0
        %436 = vmatprep.subr.mxu0 0.0
        %437 = vmatpush1.msra.mxu0 0.0
        %438 = vmatprep.subr.mxu0 0.0
        %439 = vmatpush1.msra.mxu0 0.0
        %440 = vmatprep.subr.mxu0 0.0
        %441 = vmatpush1.msra.mxu0 0.0
        %442 = vmatprep.subr.mxu0 0.0
        %443 = vmatpush1.msra.mxu0 0.0
        %444 = vmatprep.subr.mxu0 0.0
        %445 = vmatpush1.msra.mxu0 0.0
        %446 = vmatprep.mubr.f32.mxu0 0.0
        %447 = vmatmul.mubr.f32.gmra.mrb[0].mxu0 %v380
        %v448 = vpop.f32.mrb[0].mxu0
        %v449 = vadd.f32 0.0, %v448
        %v450 = vpop.f32.mrb[0].mxu0
        %451 = vdwg.mxu0
        %452 = vst.msk [vmem:[%s274] sm:$0xff] %vm286, %v449
        %s453 = sand.u32 %s128, 1
        %s454 = scalar_lea.sflag [#allocation4], %s453
        %s455 = sand.u32 %s128, 1
        %s456 = smul.addr %s455, 8
        %s457 = scalar_lea.vmem [#allocation8], %s456
        %s458 = sand.u32 %s156, 1
        %s459 = scalar_lea.sflag [#allocation10], %s458
        %s460 = sand.u32 %s156, 1
        %s461 = smul.addr %s460, 8
        %s462 = scalar_lea.vmem [#allocation9], %s461
        // Predicated region
        $region45: #{tpu_custom_call.1} parent=31 // pred_check
          %p463 = pneg %p138
        $region46: #{tpu_custom_call.1} parent=31 // pred_check_branch
          %465 = sbr.rel (%p463) target = $region48
        $region47: #{tpu_custom_call.1} parent=31 // pred_region
          %s467 = ssub.s32 128, 128
          %468 = vsyncadd %s454, %s467
          %s469 = sadd.s32 %s31, %s30
          %s470 = smul.addr %s469, 128
          %s471 = scalar_lea.hbm %s3, %s470
          %s473 = sshll.u32 %s457, 4
          %s474 = int_to_ptr.vmem [resolvable:$true] %s473
          %476 = dma.vmem_to_hbm [thread:$0]  %s474, 128, %s471, %s454
        $region48: #{tpu_custom_call.1} parent=31 // pred_fallthru
          _
        // Predicated region
        $region49: #{tpu_custom_call.1} parent=31 // pred_check
          %p477 = pneg %p166
        $region50: #{tpu_custom_call.1} parent=31 // pred_check_branch
          %479 = sbr.rel (%p477) target = $region52
        $region51: #{tpu_custom_call.1} parent=31 // pred_region
          %s481 = ssub.s32 128, 128
          %482 = vsyncadd %s459, %s481
          %s483 = sadd.s32 %s31, %s30
          %s484 = smul.addr %s483, 128
          %s485 = scalar_lea.hbm %s4, %s484
          %s487 = sshll.u32 %s462, 4
          %s488 = int_to_ptr.vmem [resolvable:$true] %s487
          %490 = dma.vmem_to_hbm [thread:$0]  %s488, 128, %s485, %s459
        $region52: #{tpu_custom_call.1} parent=31 // pred_fallthru
          _
      $region32: #{tpu_custom_call.1} parent=5 // pred_fallthru
        _
      %p491 = scmp.le.s32.totalorder 2, %s21
      // Predicated region
      $region53: #{tpu_custom_call.1} parent=5 // pred_check
        %p492 = pneg %p491
      $region54: #{tpu_custom_call.1} parent=5 // pred_check_branch
        %494 = sbr.rel (%p492) target = $region56
      $region55: #{tpu_custom_call.1} parent=5 // pred_region
        %s495 = ssub.s32 %s21, 2
        // Predicated region
        $region57: #{tpu_custom_call.1} parent=55 // pred_check
          %p496 = pneg %p144
        $region58: #{tpu_custom_call.1} parent=55 // pred_check_branch
          %498 = sbr.rel (%p496) target = $region60
        $region59: #{tpu_custom_call.1} parent=55 // pred_region
          %s499 = sand.u32 %s129, 1
          %s500 = scalar_lea.sflag [#allocation4], %s499
          %s501 = sand.u32 %s129, 1
          %s502 = smul.addr %s501, 8
          %s503 = scalar_lea.vmem [#allocation8], %s502
          %504 = dma.done %s500, 128
        $region60: #{tpu_custom_call.1} parent=55 // pred_fallthru
          _
        // Predicated region
        $region61: #{tpu_custom_call.1} parent=55 // pred_check
          %p505 = pneg %p172
        $region62: #{tpu_custom_call.1} parent=55 // pred_check_branch
          %507 = sbr.rel (%p505) target = $region64
        $region63: #{tpu_custom_call.1} parent=55 // pred_region
          %s508 = sand.u32 %s157, 1
          %s509 = scalar_lea.sflag [#allocation10], %s508
          %s510 = sand.u32 %s157, 1
          %s511 = smul.addr %s510, 8
          %s512 = scalar_lea.vmem [#allocation9], %s511
          %513 = dma.done %s509, 128
        $region64: #{tpu_custom_call.1} parent=55 // pred_fallthru
          _
      $region56: #{tpu_custom_call.1} parent=5 // pred_fallthru
        _
    $region6: #{tpu_custom_call.1} parent=1 // loop_footer
      %s25 = sadd.s32 1, %s21
    $region7: #{tpu_custom_call.1} parent=1 // loop_footer_branch
      %20 = sbr.rel target = $region3
    $region8: #{tpu_custom_call.1} parent=1 // loop_exit
      _
    %514 = vsyncpa [#allocation3], 1
    %s515 = scalar_lea.sflag [#allocation3], 1
    %516 = vsyncpa %s515, 1
    %517 = vsyncpa [#allocation6], 1
    %518 = vsyncpa [#allocation4], 1
    %s519 = scalar_lea.sflag [#allocation4], 1
    %520 = vsyncpa %s519, 1
    %521 = vsyncpa [#allocation10], 1
    %s522 = scalar_lea.sflag [#allocation10], 1
    %523 = vsyncpa %s522, 1

</llo_original>
